<compile_context>
chip_gen: v7x
topology: tpu7x:2x2x1
jax: 0.10.0
libtpu: 0.0.40
codegen_flags: <defaults>
</compile_context>

<pallas_src>
import numpy as np
import jax
import jax.numpy as jnp
from jax.experimental import pallas as pl
from jax.experimental.pallas import tpu as pltpu


# ----------------------------- Pallas kernel -------------------------------
def ece_kernel(p_ref, seq_ref, mask_ref, w1a_ref, w1b_ref, b1_ref, w2_ref,
               b2_ref, out_ref, means_sc):
    """One grid step == one tile of TB documents.

    p_ref     (TB, D, L)  bf16  clause mean-pooling matrix (rows sum to 1)
    seq_ref   (TB, L, H)  bf16  BERT sequence_output tile
    mask_ref  (TB, D, 1)  f32   1.0 for real clauses, 0.0 for padding
    w1a_ref   (H, 2H)     bf16  Pooler W^T rows for the clause-mean half
    w1b_ref   (H, 2H)     bf16  Pooler W^T rows for the CLS half
    b1_ref    (1, 2H)     f32
    w2_ref    (1, 2H)     f32   multilabel_output weight as a row
    b2_ref    (1, 1)      f32   SMEM scalar
    out_ref   (TB, D)     f32
    means_sc  (TB*D, H)   bf16  flattened masked clause means
    """
    TB, D, L = p_ref.shape
    H = seq_ref.shape[-1]
    H2 = w1a_ref.shape[-1]

    # --- per-document clause-mean pooling (bf16 MXU, f32 accumulation) ------
    cls_rows = []
    for t in range(TB):                                   # static unroll
        seq_t = seq_ref[t]                                # (L, H) bf16
        means_t = jnp.dot(p_ref[t], seq_t,
                          preferred_element_type=jnp.float32)      # (D, H) f32
        means_sc[t * D:(t + 1) * D, :] = (
            means_t * mask_ref[t]).astype(jnp.bfloat16)
        cls_rows.append(seq_t[0:1, :])                    # (1, H) bf16

    # --- CLS half of the pooler: ONE batched (TB,H)@(H,2H) matmul -----------
    cls = jnp.concatenate(cls_rows, axis=0)               # (TB, H) bf16
    cls_proj = jnp.dot(cls, w1b_ref[...],
                       preferred_element_type=jnp.float32)          # (TB, 2H)

    # --- one flattened pooler matmul over all TB*D clause rows --------------
    pre = jnp.dot(means_sc[...], w1a_ref[...],
                  preferred_element_type=jnp.float32)               # (TB*D, 2H)
    pre = pre.reshape(TB, D, H2)
    # masked broadcast of the compact CLS projection (no (TB*D,2H) scratch)
    pre = pre + mask_ref[...] * cls_proj[:, None, :] + b1_ref[...]
    pooled = jnp.tanh(pre)                                          # (TB, D, 2H)

    # --- 1-wide head: VPU broadcast-mul + lane reduction (MXU stays free) ---
    logits = jnp.sum(pooled * w2_ref[...], axis=-1) + b2_ref[0, 0]  # (TB, D)

    # --- single lane-oriented writeback for the whole tile -------------------
    out_ref[...] = logits


def _round_up(x, m):
    return (x + m - 1) // m * m


def _default_doc_tile(B, D):
    """Aim for TB*D >= 256 (v6e/v7x MXU M-dim; also a multiple of v5e's 128),
    subject to TB dividing B."""
    target = max(1, -(-256 // max(D, 1)))
    tb = min(B, target)
    while tb > 1 and B % tb != 0:
        tb -= 1
    return max(tb, 1)


def ece_forward(P, seq, mask, w1, b1, w2, b2, *, doc_tile=None):
    """P:(B,D,L) seq:(B,L,H) mask:(B,D,1) w1:(2H,2H) b1:(2H,) w2:(1,2H) b2:(1,)
    Returns logits (B, D), matching ECEmodel's squeezed logits."""
    B, D, L = P.shape
    H = seq.shape[-1]
    H2 = 2 * H
    assert w1.shape == (H2, H2) and w2.shape == (1, H2)

    TB = doc_tile if doc_tile is not None else _default_doc_tile(B, D)
    assert B % TB == 0, "doc tile must divide batch"

    # bf16 for the dominant HBM streams (seq, P); f32 accumulation in-kernel.
    P_bf = P.astype(jnp.bfloat16)
    seq_bf = seq.astype(jnp.bfloat16)

    # torch Linear computes x @ W.T + b; split the pooler weight into the
    # clause-mean half (first H input features) and the CLS half (last H).
    w1t = jnp.transpose(w1)                          # (2H_in, 2H_out)
    w1a = w1t[:H, :].astype(jnp.bfloat16)            # (H, 2H)
    w1b = w1t[H:, :].astype(jnp.bfloat16)            # (H, 2H)
    b1r = b1.reshape(1, H2).astype(jnp.float32)
    w2r = w2.reshape(1, H2).astype(jnp.float32)      # head weight as a row
    b2r = b2.reshape(1, 1).astype(jnp.float32)

    # VMEM budget: 3/4 of the physical per-core VMEM, capped at 96 MiB
    # (=> ~48 MiB on v7x's 64 MiB, 96 MiB on v5e/v6e's 128 MiB).
    try:
        vmem_cap = int(getattr(pltpu.get_tpu_info(), "vmem_capacity_bytes",
                               64 * 1024 * 1024))
    except Exception:
        vmem_cap = 64 * 1024 * 1024
    vmem_limit = min((vmem_cap * 3) // 4, 96 * 1024 * 1024)

    logits = pl.pallas_call(
        ece_kernel,
        out_shape=jax.ShapeDtypeStruct((B, D), jnp.float32),
        grid_spec=pltpu.PrefetchScalarGridSpec(
            num_scalar_prefetch=0,
            grid=(B // TB,),
            in_specs=[
                pl.BlockSpec((TB, D, L), lambda g: (g, 0, 0)),     # P (bf16)
                pl.BlockSpec((TB, L, H), lambda g: (g, 0, 0)),     # seq (bf16)
                pl.BlockSpec((TB, D, 1), lambda g: (g, 0, 0)),     # clause mask
                pl.BlockSpec((H, H2), lambda g: (0, 0)),           # W1a (bf16)
                pl.BlockSpec((H, H2), lambda g: (0, 0)),           # W1b (bf16)
                pl.BlockSpec((1, H2), lambda g: (0, 0)),           # b1
                pl.BlockSpec((1, H2), lambda g: (0, 0)),           # w2 row
                pl.BlockSpec(memory_space=pltpu.MemorySpace.SMEM), # b2 scalar
            ],
            out_specs=pl.BlockSpec((TB, D), lambda g: (g, 0)),
            scratch_shapes=[
                pltpu.VMEM((TB * D, H), jnp.bfloat16),             # means
            ]),
        compiler_params=pltpu.CompilerParams(
            dimension_semantics=("parallel",),
            vmem_limit_bytes=int(vmem_limit)),
    )(P_bf, seq_bf, mask, w1a, w1b, b1r, w2r, b2r)
    return logits                                     # (B, D)


# ------------------------------ glue (plain JAX/np) -------------------------
def build_pooling(clauses_positions, doc_lens, L, D):
    """Replicates ECEmodel.clause_output split logic as a per-doc pooling
    matrix P (rows = clauses, cols = token weights 1/len) + clause mask.
    D should be padded to a multiple of 8 (sublane alignment)."""
    B = len(doc_lens)
    P = np.zeros((B, D, L), np.float32)
    mask = np.zeros((B, D, 1), np.float32)
    for b in range(B):
        cp = clauses_positions[b]
        dl = doc_lens[b]
        split_size = [1] + [cp[i + 1] - cp[i] for i in range(dl)]
        split_size[-1] = split_size[-1] + 1          # last clause takes the SEP
        offsets = np.cumsum([0] + split_size)
        for c in range(1, dl + 1):
            s, e = int(offsets[c]), int(offsets[c + 1])
            P[b, c - 1, s:e] = 1.0 / float(e - s)
            mask[b, c - 1, 0] = 1.0
    return P, mask


def reference(seq, clauses_positions, doc_lens, D, w1, b1, w2, b2):
    """Pure numpy replica of the PyTorch forward (post-BERT), in f32."""
    seq = np.asarray(seq)
    B, L, H = seq.shape
    clause_h = np.zeros((B, D, 2 * H), np.float32)
    for b in range(B):
        cp = clauses_positions[b]
        dl = doc_lens[b]
        split_size = [1] + [cp[i + 1] - cp[i] for i in range(dl)]
        split_size[-1] += 1
        offsets = np.cumsum([0] + split_size)
        cls = seq[b, 0:1, :]
        for c in range(1, dl + 1):
            s, e = int(offsets[c]), int(offsets[c + 1])
            m = seq[b, s:e, :].mean(axis=0, keepdims=True)
            clause_h[b, c - 1] = np.concatenate([m, cls], axis=-1)[0]
    pooled = np.tanh(clause_h @ np.asarray(w1).T + np.asarray(b1))
    logits = pooled @ np.asarray(w2).T + np.asarray(b2)
    return logits[..., 0]


if __name__ == "__main__":
    # small shapes: batch=2, seq len L=16, hidden H=32 (so 2H=64)
    B, L, H = 2, 16, 32
    H2 = 2 * H

    # clause positions / doc lens (CLS at 0, SEP-like boundaries)
    clauses_positions = [[0, 4, 8, 12], [0, 3, 6, 9, 13]]
    doc_lens = [3, 4]
    # pad max-clauses D up to a multiple of 8 (sublane alignment); the clause
    # mask keeps padded rows consistent with the torch behaviour.
    D = _round_up(max(doc_lens), 8)                  # -> 8

    key = jax.random.PRNGKey(0)
    k_seq, k_ctx, k_w1, k_b1, k_w2, k_b2 = jax.random.split(key, 6)

    # synthetic BERT outputs (see TODO(synk) above)
    sequence_output = jax.random.normal(k_seq, (B, L, H), dtype=jnp.float32)
    context_h = jax.random.normal(k_ctx, (B, H), dtype=jnp.float32)  # passthrough

    # deterministic params (shapes follow nn.Linear(1536,1536), nn.Linear(1536,1))
    w1 = 0.05 * jax.random.normal(k_w1, (H2, H2), dtype=jnp.float32)  # Pooler.dense
    b1 = 0.01 * jax.random.normal(k_b1, (H2,), dtype=jnp.float32)
    w2 = 0.05 * jax.random.normal(k_w2, (1, H2), dtype=jnp.float32)   # multilabel_output
    b2 = 0.01 * jax.random.normal(k_b2, (1,), dtype=jnp.float32)

    P, clause_mask = build_pooling(clauses_positions, doc_lens, L, D)

    logits = ece_forward(jnp.asarray(P), sequence_output,
                         jnp.asarray(clause_mask), w1, b1, w2, b2)
    logits = jax.block_until_ready(logits)

    ref = reference(np.asarray(sequence_output), clauses_positions, doc_lens,
                    D, w1, b1, w2, b2)

    # padded clause rows (clause_h == 0) still go through the pooler, as in torch.
    # bf16 MXU inputs / bf16 streaming (f32 accumulation) -> loose tolerance.
    np.testing.assert_allclose(np.asarray(logits), ref, rtol=2e-2, atol=2e-2)

    # forward return tuple analog: (logits, sequence_output, context_h)
    _ = (logits, sequence_output, context_h)
    print("KERNEL_OK")
</pallas_src>

<mosaic_0001>
module attributes {stable_mosaic.version = 11 : i64} {
  func.func @ece_kernel(%arg0: i32, %arg1: memref<2x8x16xbf16, #tpu.memory_space<vmem>>, %arg2: memref<2x16x32xbf16, #tpu.memory_space<vmem>>, %arg3: memref<2x8x1xf32, #tpu.memory_space<vmem>>, %arg4: memref<32x64xbf16, #tpu.memory_space<vmem>>, %arg5: memref<32x64xbf16, #tpu.memory_space<vmem>>, %arg6: memref<1x64xf32, #tpu.memory_space<vmem>>, %arg7: memref<1x64xf32, #tpu.memory_space<vmem>>, %arg8: memref<1x1xf32, #tpu.memory_space<smem>>, %arg9: memref<2x8xf32, #tpu.memory_space<vmem>>, %arg10: memref<16x32xbf16, #tpu.memory_space<vmem>>) attributes {dimension_semantics = [#tpu.dimension_semantics<parallel>], iteration_bounds = array<i64: 1>, scalar_prefetch = 0 : i64, scratch_operands = 1 : i64, tpu.core_type = #tpu.core_type<tc>, window_params = [{transform_indices = @transform_0, window_bounds = array<i64: 2, 8, 16>}, {transform_indices = @transform_1, window_bounds = array<i64: 2, 16, 32>}, {transform_indices = @transform_2, window_bounds = array<i64: 2, 8, 1>}, {pipeline_mode = #tpu.pipeline_mode<synchronous>, transform_indices = @transform_3, window_bounds = array<i64: 32, 64>}, {pipeline_mode = #tpu.pipeline_mode<synchronous>, transform_indices = @transform_4, window_bounds = array<i64: 32, 64>}, {pipeline_mode = #tpu.pipeline_mode<synchronous>, transform_indices = @transform_5, window_bounds = array<i64: 1, 64>}, {pipeline_mode = #tpu.pipeline_mode<synchronous>, transform_indices = @transform_6, window_bounds = array<i64: 1, 64>}, {transform_indices = @transform_7, window_bounds = array<i64: 1, 1>}, {transform_indices = @transform_8, window_bounds = array<i64: 2, 8>}]} {
    %c0 = arith.constant 0 : index
    %c0_0 = arith.constant 0 : index
    %c0_1 = arith.constant 0 : index
    %0 = vector.load %arg2[%c0, %c0_0, %c0_1] : memref<2x16x32xbf16, #tpu.memory_space<vmem>>, vector<1x16x32xbf16>
    %1 = vector.shape_cast %0 : vector<1x16x32xbf16> to vector<16x32xbf16>
    %c0_2 = arith.constant 0 : index
    %c0_3 = arith.constant 0 : index
    %c0_4 = arith.constant 0 : index
    %2 = vector.load %arg1[%c0_2, %c0_3, %c0_4] : memref<2x8x16xbf16, #tpu.memory_space<vmem>>, vector<1x8x16xbf16>
    %3 = vector.shape_cast %2 : vector<1x8x16xbf16> to vector<8x16xbf16>
    %cst = arith.constant dense<0.000000e+00> : vector<8x32xf32>
    %4 = tpu.matmul %3, %1, %cst {dimension_numbers = #tpu.dot_dimension_numbers<[1], [0], [0], [1], [0, 0, 1, 1], [], []>} : vector<8x16xbf16>, vector<16x32xbf16>, vector<8x32xf32> -> vector<8x32xf32>
    %c0_5 = arith.constant 0 : index
    %c0_6 = arith.constant 0 : index
    %c0_7 = arith.constant 0 : index
    %5 = vector.load %arg3[%c0_5, %c0_6, %c0_7] : memref<2x8x1xf32, #tpu.memory_space<vmem>>, vector<1x8x1xf32>
    %6 = vector.shape_cast %5 : vector<1x8x1xf32> to vector<8x1xf32>
    %7 = vector.broadcast %6 : vector<8x1xf32> to vector<8x32xf32>
    %8 = arith.mulf %4, %7 : vector<8x32xf32>
    %9 = arith.truncf %8 : vector<8x32xf32> to vector<8x32xbf16>
    %c0_8 = arith.constant 0 : index
    %c0_9 = arith.constant 0 : index
    %10 = vector.load %arg10[%c0_8, %c0_9] : memref<16x32xbf16, #tpu.memory_space<vmem>>, vector<8x32xbf16>
    tpu.vector_store %arg10[%c0_8, %c0_9], %9 {strides = array<i32>} : memref<16x32xbf16, #tpu.memory_space<vmem>>, vector<8x32xbf16>,
    %11 = vector.extract_strided_slice %1 {offsets = [0, 0], sizes = [1, 32], strides = [1, 1]} : vector<16x32xbf16> to vector<1x32xbf16>
    %c1 = arith.constant 1 : index
    %c0_10 = arith.constant 0 : index
    %c0_11 = arith.constant 0 : index
    %12 = vector.load %arg2[%c1, %c0_10, %c0_11] : memref<2x16x32xbf16, #tpu.memory_space<vmem>>, vector<1x16x32xbf16>
    %13 = vector.shape_cast %12 : vector<1x16x32xbf16> to vector<16x32xbf16>
    %c1_12 = arith.constant 1 : index
    %c0_13 = arith.constant 0 : index
    %c0_14 = arith.constant 0 : index
    %14 = vector.load %arg1[%c1_12, %c0_13, %c0_14] : memref<2x8x16xbf16, #tpu.memory_space<vmem>>, vector<1x8x16xbf16>
    %15 = vector.shape_cast %14 : vector<1x8x16xbf16> to vector<8x16xbf16>
    %cst_15 = arith.constant dense<0.000000e+00> : vector<8x32xf32>
    %16 = tpu.matmul %15, %13, %cst_15 {dimension_numbers = #tpu.dot_dimension_numbers<[1], [0], [0], [1], [0, 0, 1, 1], [], []>} : vector<8x16xbf16>, vector<16x32xbf16>, vector<8x32xf32> -> vector<8x32xf32>
    %c1_16 = arith.constant 1 : index
    %c0_17 = arith.constant 0 : index
    %c0_18 = arith.constant 0 : index
    %17 = vector.load %arg3[%c1_16, %c0_17, %c0_18] : memref<2x8x1xf32, #tpu.memory_space<vmem>>, vector<1x8x1xf32>
    %18 = vector.shape_cast %17 : vector<1x8x1xf32> to vector<8x1xf32>
    %19 = vector.broadcast %18 : vector<8x1xf32> to vector<8x32xf32>
    %20 = arith.mulf %16, %19 : vector<8x32xf32>
    %21 = arith.truncf %20 : vector<8x32xf32> to vector<8x32xbf16>
    %c8 = arith.constant 8 : index
    %c0_19 = arith.constant 0 : index
    %22 = vector.load %arg10[%c8, %c0_19] : memref<16x32xbf16, #tpu.memory_space<vmem>>, vector<8x32xbf16>
    tpu.vector_store %arg10[%c8, %c0_19], %21 {strides = array<i32>} : memref<16x32xbf16, #tpu.memory_space<vmem>>, vector<8x32xbf16>,
    %23 = vector.extract_strided_slice %13 {offsets = [0, 0], sizes = [1, 32], strides = [1, 1]} : vector<16x32xbf16> to vector<1x32xbf16>
    %24 = tpu.concatenate %11, %23 in 0 : vector<1x32xbf16>, vector<1x32xbf16> -> vector<2x32xbf16>
    %c0_20 = arith.constant 0 : index
    %c0_21 = arith.constant 0 : index
    %25 = vector.load %arg5[%c0_20, %c0_21] : memref<32x64xbf16, #tpu.memory_space<vmem>>, vector<32x64xbf16>
    %cst_22 = arith.constant dense<0.000000e+00> : vector<2x64xf32>
    %26 = tpu.matmul %24, %25, %cst_22 {dimension_numbers = #tpu.dot_dimension_numbers<[1], [0], [0], [1], [0, 0, 1, 1], [], []>} : vector<2x32xbf16>, vector<32x64xbf16>, vector<2x64xf32> -> vector<2x64xf32>
    %c0_23 = arith.constant 0 : index
    %c0_24 = arith.constant 0 : index
    %27 = vector.load %arg10[%c0_23, %c0_24] : memref<16x32xbf16, #tpu.memory_space<vmem>>, vector<16x32xbf16>
    %c0_25 = arith.constant 0 : index
    %c0_26 = arith.constant 0 : index
    %28 = vector.load %arg4[%c0_25, %c0_26] : memref<32x64xbf16, #tpu.memory_space<vmem>>, vector<32x64xbf16>
    %cst_27 = arith.constant dense<0.000000e+00> : vector<16x64xf32>
    %29 = tpu.matmul %27, %28, %cst_27 {dimension_numbers = #tpu.dot_dimension_numbers<[1], [0], [0], [1], [0, 0, 1, 1], [], []>} : vector<16x32xbf16>, vector<32x64xbf16>, vector<16x64xf32> -> vector<16x64xf32>
    %30 = vector.shape_cast %29 : vector<16x64xf32> to vector<2x8x64xf32>
    %c0_28 = arith.constant 0 : index
    %c0_29 = arith.constant 0 : index
    %c0_30 = arith.constant 0 : index
    %31 = vector.load %arg3[%c0_28, %c0_29, %c0_30] : memref<2x8x1xf32, #tpu.memory_space<vmem>>, vector<2x8x1xf32>
    %32 = vector.shape_cast %26 : vector<2x64xf32> to vector<2x1x64xf32>
    %33 = vector.broadcast %31 : vector<2x8x1xf32> to vector<2x8x64xf32>
    %34 = vector.broadcast %32 : vector<2x1x64xf32> to vector<2x8x64xf32>
    %35 = arith.mulf %33, %34 : vector<2x8x64xf32>
    %36 = arith.addf %30, %35 : vector<2x8x64xf32>
    %c0_31 = arith.constant 0 : index
    %c0_32 = arith.constant 0 : index
    %37 = vector.load %arg6[%c0_31, %c0_32] : memref<1x64xf32, #tpu.memory_space<vmem>>, vector<1x64xf32>
    %38 = vector.shape_cast %37 : vector<1x64xf32> to vector<1x1x64xf32>
    %39 = vector.broadcast %38 : vector<1x1x64xf32> to vector<2x8x64xf32>
    %40 = arith.addf %36, %39 : vector<2x8x64xf32>
    %41 = math.tanh %40 : vector<2x8x64xf32>
    %c0_33 = arith.constant 0 : index
    %c0_34 = arith.constant 0 : index
    %42 = vector.load %arg7[%c0_33, %c0_34] : memref<1x64xf32, #tpu.memory_space<vmem>>, vector<1x64xf32>
    %43 = vector.shape_cast %42 : vector<1x64xf32> to vector<1x1x64xf32>
    %44 = vector.broadcast %43 : vector<1x1x64xf32> to vector<2x8x64xf32>
    %45 = arith.mulf %41, %44 : vector<2x8x64xf32>
    %cst_35 = arith.constant dense<0.000000e+00> : vector<2x8xf32>
    %46 = vector.multi_reduction <add>, %45, %cst_35 [2] : vector<2x8x64xf32> to vector<2x8xf32>
    %c0_36 = arith.constant 0 : index
    %c0_37 = arith.constant 0 : index
    %47 = memref.load %arg8[%c0_36, %c0_37] : memref<1x1xf32, #tpu.memory_space<smem>>
    %48 = vector.broadcast %47 : f32 to vector<2x8xf32>
    %49 = arith.addf %46, %48 : vector<2x8xf32>
    %c0_38 = arith.constant 0 : index
    %c0_39 = arith.constant 0 : index
    %50 = vector.load %arg9[%c0_38, %c0_39] : memref<2x8xf32, #tpu.memory_space<vmem>>, vector<2x8xf32>
    tpu.vector_store %arg9[%c0_38, %c0_39], %49 {strides = array<i32>} : memref<2x8xf32, #tpu.memory_space<vmem>>, vector<2x8xf32>,
    return
  }
  func.func @transform_0(%arg0: i32) -> (i32, i32, i32) {
    %c0_i32 = arith.constant 0 : i32
    %c0_i32_0 = arith.constant 0 : i32
    %c0_i32_1 = arith.constant 0 : i32
    return %arg0, %c0_i32, %c0_i32_0 : i32, i32, i32
  }
  func.func @transform_1(%arg0: i32) -> (i32, i32, i32) {
    %c0_i32 = arith.constant 0 : i32
    %c0_i32_0 = arith.constant 0 : i32
    %c0_i32_1 = arith.constant 0 : i32
    return %arg0, %c0_i32, %c0_i32_0 : i32, i32, i32
  }
  func.func @transform_2(%arg0: i32) -> (i32, i32, i32) {
    %c0_i32 = arith.constant 0 : i32
    %c0_i32_0 = arith.constant 0 : i32
    %c0_i32_1 = arith.constant 0 : i32
    return %arg0, %c0_i32, %c0_i32_0 : i32, i32, i32
  }
  func.func @transform_3(%arg0: i32) -> (i32, i32) {
    %c0_i32 = arith.constant 0 : i32
    %c0_i32_0 = arith.constant 0 : i32
    %c0_i32_1 = arith.constant 0 : i32
    return %c0_i32, %c0_i32_0 : i32, i32
  }
  func.func @transform_4(%arg0: i32) -> (i32, i32) {
    %c0_i32 = arith.constant 0 : i32
    %c0_i32_0 = arith.constant 0 : i32
    %c0_i32_1 = arith.constant 0 : i32
    return %c0_i32, %c0_i32_0 : i32, i32
  }
  func.func @transform_5(%arg0: i32) -> (i32, i32) {
    %c0_i32 = arith.constant 0 : i32
    %c0_i32_0 = arith.constant 0 : i32
    %c0_i32_1 = arith.constant 0 : i32
    return %c0_i32, %c0_i32_0 : i32, i32
  }
  func.func @transform_6(%arg0: i32) -> (i32, i32) {
    %c0_i32 = arith.constant 0 : i32
    %c0_i32_0 = arith.constant 0 : i32
    %c0_i32_1 = arith.constant 0 : i32
    return %c0_i32, %c0_i32_0 : i32, i32
  }
  func.func @transform_7(%arg0: i32) -> (i32, i32) {
    %c0_i32 = arith.constant 0 : i32
    %c0_i32_0 = arith.constant 0 : i32
    %c0_i32_1 = arith.constant 0 : i32
    return %c0_i32, %c0_i32_0 : i32, i32
  }
  func.func @transform_8(%arg0: i32) -> (i32, i32) {
    %c0_i32 = arith.constant 0 : i32
    %c0_i32_0 = arith.constant 0 : i32
    return %arg0, %c0_i32 : i32, i32
  }
}

</mosaic_0001>

<llo_original>
// kernel: tpu_custom_call.1
$region0: #{tpu_custom_call.1}
  #allocation0 [shape = 'u32[]', space=smem, size = 0x4, offset = 0x4, fixed_abs, tag = 'smem constant byte address 0x4 - core index']
  #allocation1 [shape = 'u32[144,128]{1,0:T(1,128)}', space=vmem, size = 0x12000, scoped, tag = 'internal scratch']
  #allocation2 [shape = 'bf16[16,32]{1,0:T(16,128)(2,1)}', space=vmem, size = 0x1000, scoped, tag = 'scratch operand']
  #allocation3 [shape = 'f32[1,1]{1,0:T(1,128)S(6)}', space=smem, size = 0x200, scoped, tag = 'scoped memory for tpu_custom_call.1']
  %s0 = inlined_call_operand.hbm [shape: bf16[2,8,16], index: 0, kind: input, shape index: {}]
  %s1 = inlined_call_operand.vmem [shape: bf16[2,16,32], index: 1, kind: input, shape index: {}]
  %s2 = inlined_call_operand.vmem [shape: f32[2,8,1], index: 2, kind: input, shape index: {}]
  %s3 = inlined_call_operand.vmem [shape: bf16[32,64], index: 3, kind: input, shape index: {}]
  %s4 = inlined_call_operand.hbm [shape: bf16[32,64], index: 4, kind: input, shape index: {}]
  %s5 = inlined_call_operand.vmem [shape: f32[1,64], index: 5, kind: input, shape index: {}]
  %s6 = inlined_call_operand.vmem [shape: f32[1,64], index: 6, kind: input, shape index: {}]
  %s7 = inlined_call_operand.<no memory space> [shape: f32[1,1], index: 7, kind: input, shape index: {}]
  %s8 = inlined_call_operand.hbm [shape: f32[2,8], index: 8, kind: output, shape index: {}]
  %s9 = sld [smem:[#allocation0]]
  $region50: #{tpu_custom_call.1} parent=0
    _
  %s11 = ssub.s32 1, %s9
  %s12 = scalar_select 0, %s11, %s9
  %13 = sst [smem:[#allocation3]] %s7
  $region1: #{tpu_custom_call.1} parent=0
    #allocation4 [shape = 'u8[4096]{0}', space=vmem, size = 0x1000, scoped, tag = 'input window, operand 0, single buffered']
    #allocation5 [shape = 's32[1]{0}', space=sflag, size = 0x4, scoped, tag = 'scoped memory for tpu_custom_call.1']
    #allocation6 [shape = 's32[1]{0}', space=sflag, size = 0x4, scoped, tag = 'scoped memory for tpu_custom_call.1']
    #allocation7 [shape = 'u8[8192]{0}', space=vmem, size = 0x2000, scoped, tag = 'input window, operand 4, single buffered']
    #allocation8 [shape = 's32[1]{0}', space=sflag, size = 0x4, scoped, tag = 'scoped memory for tpu_custom_call.1']
    #allocation9 [shape = 'u8[1024]{0}', space=vmem, size = 0x400, scoped, tag = 'output window, operand 0, single buffered']
    %14 = vsyncpa [#allocation5], 0
    %15 = vsyncpa [#allocation8], 0
    %16 = vsyncpa [#allocation6], 0
    // Predicated region
    $region2: #{tpu_custom_call.1} parent=1 // pred_check
      _
    $region3: #{tpu_custom_call.1} parent=1 // pred_check_branch
      %18 = sbr.rel (0) target = $region5
    $region4: #{tpu_custom_call.1} parent=1 // pred_region
      %s20 = ssub.s32 128, 128
      %21 = vsyncadd [#allocation5], %s20
      %s22 = sshll.u32 [#allocation4], 4
      %s23 = int_to_ptr.vmem [resolvable:$true] %s22
      %28 = dma.hbm_to_vmem [thread:$0]  %s0, 128, %s23, [#allocation5], 64, 64, 4
    $region5: #{tpu_custom_call.1} parent=1 // pred_fallthru
      _
    // Predicated region
    $region6: #{tpu_custom_call.1} parent=1 // pred_check
      _
    $region7: #{tpu_custom_call.1} parent=1 // pred_check_branch
      %30 = sbr.rel (0) target = $region9
    $region8: #{tpu_custom_call.1} parent=1 // pred_region
      _
    $region9: #{tpu_custom_call.1} parent=1 // pred_fallthru
      _
    // Predicated region
    $region10: #{tpu_custom_call.1} parent=1 // pred_check
      _
    $region11: #{tpu_custom_call.1} parent=1 // pred_check_branch
      %32 = sbr.rel (0) target = $region13
    $region12: #{tpu_custom_call.1} parent=1 // pred_region
      _
    $region13: #{tpu_custom_call.1} parent=1 // pred_fallthru
      _
    // Predicated region
    $region14: #{tpu_custom_call.1} parent=1 // pred_check
      _
    $region15: #{tpu_custom_call.1} parent=1 // pred_check_branch
      %34 = sbr.rel (0) target = $region17
    $region16: #{tpu_custom_call.1} parent=1 // pred_region
      _
    $region17: #{tpu_custom_call.1} parent=1 // pred_fallthru
      _
    // Predicated region
    $region18: #{tpu_custom_call.1} parent=1 // pred_check
      _
    $region19: #{tpu_custom_call.1} parent=1 // pred_check_branch
      %36 = sbr.rel (0) target = $region21
    $region20: #{tpu_custom_call.1} parent=1 // pred_region
      %s38 = ssub.s32 256, 256
      %39 = vsyncadd [#allocation8], %s38
      %s40 = sshll.u32 [#allocation7], 4
      %s41 = int_to_ptr.vmem [resolvable:$true] %s40
      %46 = dma.hbm_to_vmem [thread:$0]  %s4, 256, %s41, [#allocation8], 64, 64, 4
    $region21: #{tpu_custom_call.1} parent=1 // pred_fallthru
      _
    // Predicated region
    $region22: #{tpu_custom_call.1} parent=1 // pred_check
      _
    $region23: #{tpu_custom_call.1} parent=1 // pred_check_branch
      %48 = sbr.rel (0) target = $region25
    $region24: #{tpu_custom_call.1} parent=1 // pred_region
      _
    $region25: #{tpu_custom_call.1} parent=1 // pred_fallthru
      _
    // Predicated region
    $region26: #{tpu_custom_call.1} parent=1 // pred_check
      _
    $region27: #{tpu_custom_call.1} parent=1 // pred_check_branch
      %50 = sbr.rel (0) target = $region29
    $region28: #{tpu_custom_call.1} parent=1 // pred_region
      _
    $region29: #{tpu_custom_call.1} parent=1 // pred_fallthru
      _
    // Predicated region
    $region30: #{tpu_custom_call.1} parent=1 // pred_check
      _
    $region31: #{tpu_custom_call.1} parent=1 // pred_check_branch
      %52 = sbr.rel (0) target = $region33
    $region32: #{tpu_custom_call.1} parent=1 // pred_region
      _
    $region33: #{tpu_custom_call.1} parent=1 // pred_fallthru
      _
    // Predicated region
    $region34: #{tpu_custom_call.1} parent=1 // pred_check
      _
    $region35: #{tpu_custom_call.1} parent=1 // pred_check_branch
      %54 = sbr.rel (0) target = $region37
    $region36: #{tpu_custom_call.1} parent=1 // pred_region
      %55 = dma.done [#allocation5], 128
    $region37: #{tpu_custom_call.1} parent=1 // pred_fallthru
      _
    // Predicated region
    $region38: #{tpu_custom_call.1} parent=1 // pred_check
      _
    $region39: #{tpu_custom_call.1} parent=1 // pred_check_branch
      %57 = sbr.rel (0) target = $region41
    $region40: #{tpu_custom_call.1} parent=1 // pred_region
      %58 = dma.done [#allocation8], 256
    $region41: #{tpu_custom_call.1} parent=1 // pred_fallthru
      _
    %v60 = vld [vmem:[%s1] sm:$0xf]
    %v61 = vld [vmem:[%s1 + $0x4] sm:$0xf]
    %v62 = vld [vmem:[#allocation4] sm:$0xf]
    %v65 = vunpack.c.l.b16 %v60
    %v66 = vunpack.c.l.b16 %v61
    %v67 = vpack.c.b16 %v66, %v65
    %vm69 = vcmask 130048
    %v71 = vsel %vm69, %v62, 0
    %73 = vmatprep.subr.bf16.mxu0 0
    %74 = vmatpush1.bf16.msra.mxu0 %v67
    %75 = vmatprep.subr.bf16.mxu0 0
    %76 = vmatpush1.bf16.msra.mxu0 0
    %77 = vmatprep.subr.bf16.mxu0 0
    %78 = vmatpush1.bf16.msra.mxu0 0
    %79 = vmatprep.subr.bf16.mxu0 0
    %80 = vmatpush1.bf16.msra.mxu0 0
    %81 = vmatprep.subr.bf16.mxu0 0
    %82 = vmatpush1.bf16.msra.mxu0 0
    %83 = vmatprep.subr.bf16.mxu0 0
    %84 = vmatpush1.bf16.msra.mxu0 0
    %85 = vmatprep.subr.bf16.mxu0 0
    %86 = vmatpush1.bf16.msra.mxu0 0
    %87 = vmatprep.subr.bf16.mxu0 0
    %88 = vmatpush1.bf16.msra.mxu0 0
    %89 = vmatprep.subr.bf16.mxu0 0
    %90 = vmatpush1.bf16.msra.mxu0 0
    %91 = vmatprep.subr.bf16.mxu0 0
    %92 = vmatpush1.bf16.msra.mxu0 0
    %93 = vmatprep.subr.bf16.mxu0 0
    %94 = vmatpush1.bf16.msra.mxu0 0
    %95 = vmatprep.subr.bf16.mxu0 0
    %96 = vmatpush1.bf16.msra.mxu0 0
    %97 = vmatprep.subr.bf16.mxu0 0
    %98 = vmatpush1.bf16.msra.mxu0 0
    %99 = vmatprep.subr.bf16.mxu0 0
    %100 = vmatpush1.bf16.msra.mxu0 0
    %101 = vmatprep.subr.bf16.mxu0 0
    %102 = vmatpush1.bf16.msra.mxu0 0
    %103 = vmatprep.subr.bf16.mxu0 0
    %104 = vmatpush1.bf16.msra.mxu0 0
    %105 = vmatprep.mubr.bf16.mxu0 0
    %106 = vmatmul.mubr.bf16.gmra.mrb[0].mxu0 %v71
    %v107 = vpop.f32.mrb[0].mxu0
    %v108 = vadd.f32 0.0, %v107
    %v109 = vpop.f32.mrb[0].mxu0
    %v110 = vpop.f32.mrb[0].mxu0
    %v111 = vpop.f32.mrb[0].mxu0
    %112 = vdwg.mxu0
    %v113 = vld [vmem:[%s2] sm:$0xff]
    %115 = vset.pattern.permute.xlu0 0
    %116 = vperm.xlu0 %115, %v113
    %v117 = vpop.permute.xlu0 %116
    %v119 = vmul.f32 %v108, %v117
    %v120 = vpack.c.bf16 %v119, %v119
    %vm121 = vcmask 257024
    %122 = vst.msk [vmem:[#allocation2] sm:$0xf] %vm121, %v120
    %s123 = scalar_lea.vmem %s1, 8
    %v124 = vld [vmem:[%s123] sm:$0xf]
    %v125 = vld [vmem:[%s123 + $0x4] sm:$0xf]
    %s126 = scalar_lea.vmem [#allocation4], 4
    %v127 = vld [vmem:[%s126] sm:$0xf]
    %v130 = vunpack.c.l.b16 %v124
    %v131 = vunpack.c.l.b16 %v125
    %v132 = vpack.c.b16 %v131, %v130
    %v135 = vsel %vm69, %v127, 0
    %137 = vmatprep.subr.bf16.mxu0 0
    %138 = vmatpush1.bf16.msra.mxu0 %v132
    %139 = vmatprep.subr.bf16.mxu0 0
    %140 = vmatpush1.bf16.msra.mxu0 0
    %141 = vmatprep.subr.bf16.mxu0 0
    %142 = vmatpush1.bf16.msra.mxu0 0
    %143 = vmatprep.subr.bf16.mxu0 0
    %144 = vmatpush1.bf16.msra.mxu0 0
    %145 = vmatprep.subr.bf16.mxu0 0
    %146 = vmatpush1.bf16.msra.mxu0 0
    %147 = vmatprep.subr.bf16.mxu0 0
    %148 = vmatpush1.bf16.msra.mxu0 0
    %149 = vmatprep.subr.bf16.mxu0 0
    %150 = vmatpush1.bf16.msra.mxu0 0
    %151 = vmatprep.subr.bf16.mxu0 0
    %152 = vmatpush1.bf16.msra.mxu0 0
    %153 = vmatprep.subr.bf16.mxu0 0
    %154 = vmatpush1.bf16.msra.mxu0 0
    %155 = vmatprep.subr.bf16.mxu0 0
    %156 = vmatpush1.bf16.msra.mxu0 0
    %157 = vmatprep.subr.bf16.mxu0 0
    %158 = vmatpush1.bf16.msra.mxu0 0
    %159 = vmatprep.subr.bf16.mxu0 0
    %160 = vmatpush1.bf16.msra.mxu0 0
    %161 = vmatprep.subr.bf16.mxu0 0
    %162 = vmatpush1.bf16.msra.mxu0 0
    %163 = vmatprep.subr.bf16.mxu0 0
    %164 = vmatpush1.bf16.msra.mxu0 0
    %165 = vmatprep.subr.bf16.mxu0 0
    %166 = vmatpush1.bf16.msra.mxu0 0
    %167 = vmatprep.subr.bf16.mxu0 0
    %168 = vmatpush1.bf16.msra.mxu0 0
    %169 = vmatprep.mubr.bf16.mxu0 0
    %170 = vmatmul.mubr.bf16.gmra.mrb[0].mxu0 %v135
    %v171 = vpop.f32.mrb[0].mxu0
    %v172 = vadd.f32 0.0, %v171
    %v173 = vpop.f32.mrb[0].mxu0
    %v174 = vpop.f32.mrb[0].mxu0
    %v175 = vpop.f32.mrb[0].mxu0
    %176 = vdwg.mxu0
    %s177 = scalar_lea.vmem %s2, 8
    %v178 = vld [vmem:[%s177] sm:$0xff]
    %180 = vset.pattern.permute.xlu0 0
    %181 = vperm.xlu0 %180, %v178
    %v182 = vpop.permute.xlu0 %181
    %v184 = vmul.f32 %v172, %v182
    %v185 = vpack.c.bf16 %v184, %v184
    %v187 = vrot.slane %v185, 4
    %vm189 = vcmask 261124
    %190 = vst.msk [vmem:[#allocation2] sm:$0xf0] %vm189, %v187
    %v191 = vpack.c.b16 %v130, %v130
    %v193 = vshll.u32 %v191, 16
    %vm196 = vcmask 1040384
    %vm197 = vsmask.f32 256
    %vm198 = vmand %vm196, %vm197
    %v199 = vsel %vm198, %v60, %v193
    %v200 = vld [vmem:[#allocation7] sm:$0xf]
    %v201 = vld [vmem:[#allocation7 + $0x4] sm:$0xf]
    %v202 = vld [vmem:[#allocation7 + $0x8] sm:$0xf]
    %v203 = vld [vmem:[#allocation7 + $0xc] sm:$0xf]
    %v208 = vunpack.c.l.b16 %v200
    %v209 = vunpack.c.l.b16 %v201
    %v210 = vunpack.c.l.b16 %v202
    %v211 = vunpack.c.l.b16 %v203
    %v212 = vpack.c.b16 %v209, %v208
    %v213 = vpack.c.b16 %v211, %v210
    %vm216 = vcmask 261120
    %v218 = vsel %vm216, %v199, 0
    %220 = vmatprep.subr.bf16.mxu0 0
    %221 = vmatpush1.bf16.msra.mxu0 %v212
    %222 = vmatprep.subr.bf16.mxu0 0
    %223 = vmatpush1.bf16.msra.mxu0 %v213
    %224 = vmatprep.subr.bf16.mxu0 0
    %225 = vmatpush1.bf16.msra.mxu0 0
    %226 = vmatprep.subr.bf16.mxu0 0
    %227 = vmatpush1.bf16.msra.mxu0 0
    %228 = vmatprep.subr.bf16.mxu0 0
    %229 = vmatpush1.bf16.msra.mxu0 0
    %230 = vmatprep.subr.bf16.mxu0 0
    %231 = vmatpush1.bf16.msra.mxu0 0
    %232 = vmatprep.subr.bf16.mxu0 0
    %233 = vmatpush1.bf16.msra.mxu0 0
    %234 = vmatprep.subr.bf16.mxu0 0
    %235 = vmatpush1.bf16.msra.mxu0 0
    %236 = vmatprep.subr.bf16.mxu0 0
    %237 = vmatpush1.bf16.msra.mxu0 0
    %238 = vmatprep.subr.bf16.mxu0 0
    %239 = vmatpush1.bf16.msra.mxu0 0
    %240 = vmatprep.subr.bf16.mxu0 0
    %241 = vmatpush1.bf16.msra.mxu0 0
    %242 = vmatprep.subr.bf16.mxu0 0
    %243 = vmatpush1.bf16.msra.mxu0 0
    %244 = vmatprep.subr.bf16.mxu0 0
    %245 = vmatpush1.bf16.msra.mxu0 0
    %246 = vmatprep.subr.bf16.mxu0 0
    %247 = vmatpush1.bf16.msra.mxu0 0
    %248 = vmatprep.subr.bf16.mxu0 0
    %249 = vmatpush1.bf16.msra.mxu0 0
    %250 = vmatprep.subr.bf16.mxu0 0
    %251 = vmatpush1.bf16.msra.mxu0 0
    %252 = vmatprep.mubr.bf16.mxu0 0
    %253 = vmatmul.mubr.bf16.gmra.mrb[0].mxu0 %v218
    %v254 = vpop.f32.mrb[0].mxu0
    %v255 = vadd.f32 0.0, %v254
    %v256 = vpop.f32.mrb[0].mxu0
    %v257 = vpop.f32.mrb[0].mxu0
    %v258 = vpop.f32.mrb[0].mxu0
    %259 = vdwg.mxu0
    %v260 = vld [vmem:[#allocation2] sm:$0xff]
    %v261 = vld [vmem:[%s3] sm:$0xf]
    %v262 = vld [vmem:[%s3 + $0x4] sm:$0xf]
    %v263 = vld [vmem:[%s3 + $0x8] sm:$0xf]
    %v264 = vld [vmem:[%s3 + $0xc] sm:$0xf]
    %v269 = vunpack.c.l.b16 %v261
    %v270 = vunpack.c.l.b16 %v262
    %v271 = vunpack.c.l.b16 %v263
    %v272 = vunpack.c.l.b16 %v264
    %v273 = vpack.c.b16 %v270, %v269
    %v274 = vpack.c.b16 %v272, %v271
    %v278 = vsel %vm216, %v260, 0
    %280 = vmatprep.subr.bf16.mxu0 0
    %281 = vmatpush1.bf16.msra.mxu0 %v273
    %282 = vmatprep.subr.bf16.mxu0 0
    %283 = vmatpush1.bf16.msra.mxu0 %v274
    %284 = vmatprep.subr.bf16.mxu0 0
    %285 = vmatpush1.bf16.msra.mxu0 0
    %286 = vmatprep.subr.bf16.mxu0 0
    %287 = vmatpush1.bf16.msra.mxu0 0
    %288 = vmatprep.subr.bf16.mxu0 0
    %289 = vmatpush1.bf16.msra.mxu0 0
    %290 = vmatprep.subr.bf16.mxu0 0
    %291 = vmatpush1.bf16.msra.mxu0 0
    %292 = vmatprep.subr.bf16.mxu0 0
    %293 = vmatpush1.bf16.msra.mxu0 0
    %294 = vmatprep.subr.bf16.mxu0 0
    %295 = vmatpush1.bf16.msra.mxu0 0
    %296 = vmatprep.subr.bf16.mxu0 0
    %297 = vmatpush1.bf16.msra.mxu0 0
    %298 = vmatprep.subr.bf16.mxu0 0
    %299 = vmatpush1.bf16.msra.mxu0 0
    %300 = vmatprep.subr.bf16.mxu0 0
    %301 = vmatpush1.bf16.msra.mxu0 0
    %302 = vmatprep.subr.bf16.mxu0 0
    %303 = vmatpush1.bf16.msra.mxu0 0
    %304 = vmatprep.subr.bf16.mxu0 0
    %305 = vmatpush1.bf16.msra.mxu0 0
    %306 = vmatprep.subr.bf16.mxu0 0
    %307 = vmatpush1.bf16.msra.mxu0 0
    %308 = vmatprep.subr.bf16.mxu0 0
    %309 = vmatpush1.bf16.msra.mxu0 0
    %310 = vmatprep.subr.bf16.mxu0 0
    %311 = vmatpush1.bf16.msra.mxu0 0
    %312 = vmatprep.mubr.bf16.mxu0 0
    %313 = vmatmul.mubr.bf16.gmra.mrb[0].mxu0 %v278
    %v314 = vpop.f32.mrb[0].mxu0
    %v315 = vadd.f32 0.0, %v314
    %v316 = vpop.f32.mrb[0].mxu0
    %v317 = vpop.f32.mrb[0].mxu0
    %v318 = vadd.f32 0.0, %v317
    %v319 = vpop.f32.mrb[0].mxu0
    %320 = vdwg.mxu0
    %v321 = vld [vmem:[%s2] sm:$0xff]
    %v322 = vld [vmem:[%s2 + $0x8] sm:$0xff]
    %v325 = vunpack.c.l.s4 1966171168
    %v326 = vunpack.c.0.s8 %v325
    %v327 = vlaneseq
    %v328 = vshrl.u32 %v327, 7
    %v329 = vsub.s32 %v326, %v328
    %v330 = vrot.slane %v255, %v329
    %v331 = vcombine.high %v330, %v330
    %v333 = vunpack.c.l.s4 1966171168
    %v334 = vunpack.c.0.s8 %v333
    %v335 = vlaneseq
    %v336 = vshrl.u32 %v335, 7
    %v337 = vsub.s32 %v334, %v336
    %v338 = vrot.slane %v330, %v337
    %v340 = vunpack.c.l.s4 1966171168
    %v341 = vunpack.c.0.s8 %v340
    %v342 = vlaneseq
    %v343 = vshrl.u32 %v342, 7
    %v344 = vsub.s32 %v341, %v343
    %v345 = vrot.slane %v331, %v344
    %347 = vset.pattern.permute.xlu0 0
    %348 = vperm.xlu0 %347, %v321
    %v349 = vpop.permute.xlu0 %348
    %352 = vset.pattern.permute.xlu0 0
    %353 = vperm.xlu0 %352, %v322
    %v354 = vpop.permute.xlu0 %353
    %v356 = vlaneseq
    %v357 = vshrl.u32 %v356, 7
    %v358 = vsub.s32 0, %v357
    %v359 = vrot.slane %v338, %v358
    %v360 = vlaneseq
    %v361 = vshrl.u32 %v360, 7
    %v362 = vsub.s32 0, %v361
    %v363 = vrot.slane %v345, %v362
    %v366 = vmul.f32 %v349, %v359
    %v367 = vmul.f32 %v354, %v363
    %v368 = vadd.f32 %v315, %v366
    %v369 = vadd.f32 %v318, %v367
    %v370 = vld [vmem:[%s5] sm:$0x1]
    %v372 = vlaneseq
    %v373 = vshrl.u32 %v372, 7
    %v374 = vsub.s32 0, %v373
    %v375 = vrot.slane %v370, %v374
    %v377 = vadd.f32 %v368, %v375
    %v378 = vadd.f32 %v369, %v375
    %v379 = vtanh.pop %v377
    %v380 = vtanh.pop %v378
    %v381 = vld [vmem:[%s6] sm:$0x1]
    %v383 = vlaneseq
    %v384 = vshrl.u32 %v383, 7
    %v385 = vsub.s32 0, %v384
    %v386 = vrot.slane %v381, %v385
    %v388 = vmul.f32 %v379, %v386
    %v389 = vmul.f32 %v380, %v386
    %vm390 = vcmask 523264
    %v391 = vsel %vm390, %v388, 0.0
    %392 = vadd.xlane.f32.xlu0 %v391
    %v393 = vpop.xlane.xlu0 %392
    %v394 = vsel %vm390, %v389, 0.0
    %395 = vadd.xlane.f32.xlu0 %v394
    %v396 = vpop.xlane.xlu0 %395
    %s397 = sld [smem:[#allocation3]]
    %v398 = vstv %s397
    %v399 = vadd.f32 %v393, %v398
    %v400 = vadd.f32 %v396, %v398
    %v403 = vlaneseq
    %v404 = vand.u32 %v403, 127
    %v405 = vlaneseq
    %v406 = vshrl.u32 %v405, 7
    %v407 = vsub.s32 %v404, %v406
    %v408 = vrot.slane %v399, %v407
    %v409 = vlaneseq
    %v410 = vshrl.u32 %v409, 7
    %v411 = vsub.s32 %v404, %v410
    %v412 = vrot.slane %v400, %v411
    %vm413 = vcmask 1041409
    %v414 = vsel %vm413, %v412, %v408
    %vm416 = vcmask 58368
    %417 = vst.msk [vmem:[#allocation9] sm:$0x3] %vm416, %v414
    // Predicated region
    $region42: #{tpu_custom_call.1} parent=1 // pred_check
      _
    $region43: #{tpu_custom_call.1} parent=1 // pred_check_branch
      %419 = sbr.rel (0) target = $region45
    $region44: #{tpu_custom_call.1} parent=1 // pred_region
      %s421 = ssub.s32 32, 32
      %422 = vsyncadd [#allocation6], %s421
      %s424 = sshll.u32 [#allocation9], 4
      %s425 = int_to_ptr.vmem [resolvable:$true] %s424
      %427 = dma.vmem_to_hbm [thread:$0]  %s425, 32, %s8, [#allocation6]
    $region45: #{tpu_custom_call.1} parent=1 // pred_fallthru
      _
    // Predicated region
    $region46: #{tpu_custom_call.1} parent=1 // pred_check
      _
    $region47: #{tpu_custom_call.1} parent=1 // pred_check_branch
      %429 = sbr.rel (0) target = $region49
    $region48: #{tpu_custom_call.1} parent=1 // pred_region
      %430 = dma.done [#allocation6], 32
    $region49: #{tpu_custom_call.1} parent=1 // pred_fallthru
      _
    %431 = vsyncpa [#allocation5], 1
    %432 = vsyncpa [#allocation8], 1
    %433 = vsyncpa [#allocation6], 1

</llo_original>
